<compile_context>
chip_gen: v7x
topology: tpu7x:2x2x1
jax: 0.10.0
libtpu: 0.0.40
codegen_flags: <defaults>
</compile_context>

<pallas_src>
import math
import functools

import jax
import jax.numpy as jnp
from jax import lax
from jax.experimental import pallas as pl
from jax.experimental.pallas import tpu as pltpu


def _round_up(x, m):
    return ((x + m - 1) // m) * m


def _sbvf_kernel(wi_ref, we_ref, out_ref, *, num_steps, res_scale, batch,
                 block_rows, use_mxu_count):
    """One (block_rows, N) row block -> one (1, 128) partial-loss output block."""
    i = pl.program_id(0)

    wi = wi_ref[...].astype(jnp.float32)          # (TB, N)
    we = we_ref[...].astype(jnp.float32)          # (TB, N)
    res = wi - we
    tb, n = res.shape

    # Per-row sum of squared residuals: plain f32 reduce (VPU + lane reduce).
    sumsq = jnp.sum(res * res, axis=1, keepdims=True)             # (TB, 1)

    vals = jnp.abs(res) if res_scale else jnp.abs(wi)              # (TB, N)

    # ---- exact top-k sum via bit-level threshold bisection ----------------
    # For non-negative f32 the int32 bit pattern is order-preserving, so the
    # k-th largest value is binary-searched one bit at a time: 31 fixed
    # {compare, masked-count} passes, independent of k.
    vi = pltpu.bitcast(vals, jnp.int32)                            # (TB, N)
    kf = jnp.float32(num_steps)

    if use_mxu_count:
        # bf16 ones RHS built once per grid step (N*256 B; negligible vs the
        # 31 N-wide passes).  {0,1} in bf16 with f32 accumulation is exact.
        ones_lane = jnp.ones((n, 128), dtype=jnp.bfloat16)

    thr = jnp.zeros((tb, 1), dtype=jnp.int32)
    for bit in range(30, -1, -1):                  # sign bit is always 0
        cand = thr | jnp.int32(1 << bit)
        ge = vi >= cand
        if use_mxu_count:
            mask = jnp.where(ge, jnp.bfloat16(1.0), jnp.bfloat16(0.0))
            cnt = jnp.dot(mask, ones_lane,
                          preferred_element_type=jnp.float32)[:, :1]
        else:
            cnt = jnp.sum(jnp.where(ge, 1.0, 0.0).astype(jnp.float32),
                          axis=1, keepdims=True)
        thr = jnp.where(cnt >= kf, cand, thr)
    # thr now holds the bit pattern of each row's k-th largest value.
    gt = vi > thr
    cnt_gt = jnp.sum(jnp.where(gt, 1.0, 0.0).astype(jnp.float32),
                     axis=1, keepdims=True)
    sum_gt = jnp.sum(jnp.where(gt, vals, 0.0), axis=1, keepdims=True)
    thr_f = pltpu.bitcast(thr, jnp.float32)
    # Exact tie handling: strictly-greater values + (k - #greater) copies of
    # thr == same multiset sum as sort-descending-take-k.
    topk_sum = sum_gt + (kf - cnt_gt) * thr_f                      # (TB, 1)

    # Mask rows beyond the true batch (partial tail block reads padding).
    row = i * block_rows + lax.broadcasted_iota(jnp.int32, (tb, 1), 0)
    valid = row < batch
    topk_safe = jnp.where(valid, topk_sum, jnp.float32(1.0))

    # alpha = 1 / mean(top-k) = k / sum(top-k); reciprocal runs on the EUP.
    alpha = kf * pl.reciprocal(topk_safe, approx=False)
    contrib = jnp.where(valid, alpha * alpha * sumsq, 0.0)         # (TB, 1)

    total = jnp.sum(contrib, axis=0, keepdims=True)                # (1, 1)
    out_ref[...] = jnp.broadcast_to(total, (1, 128))


def sbvf_loss(wi, we, scale_par=0.3, res_scale=False, block_rows=None,
              use_mxu_count=None):
    """Pallas implementation of SBVFLoss.forward.  wi, we: (B, N)."""
    assert wi.ndim == 2 and wi.shape == we.shape
    B, N = wi.shape

    num_steps = math.floor(scale_par * N)
    if num_steps == 0:
        num_steps = 1
    num_steps = min(num_steps, N)   # slicing past N == taking all N values

    # ---- generation-aware block / VMEM budget ------------------------------
    try:
        vmem_cap = pltpu.get_tpu_info().vmem_capacity_bytes
    except Exception:
        vmem_cap = 128 * 1024 * 1024
    if vmem_cap >= 100 * 1024 * 1024:          # v5e / v6e: 128 MiB per TC
        blk_budget = 4 * 1024 * 1024
        vmem_limit = 64 * 1024 * 1024
    else:                                      # v7x: 64 MiB per TC
        blk_budget = 2 * 1024 * 1024
        vmem_limit = 32 * 1024 * 1024

    # MXU count offload pays off on v6e/v7x (big MXU, otherwise idle); keep
    # the VPU/XLU reduce on v5e and older.
    if use_mxu_count is None:
        try:
            kind = jax.devices()[0].device_kind.lower()
        except Exception:
            kind = ""
        use_mxu_count = any(tag in kind for tag in ("v6", "6e", "v7", "7x"))

    # ---- row-block size: biggest multiple of 8 within the budget, <= B -----
    if block_rows is None:
        if B <= 8:
            tb = B                              # single full-extent block
        else:
            tb = blk_budget // max(4 * N, 1)
            tb = max(8, min(1024, (tb // 8) * 8))
            tb = min(tb, (B // 8) * 8)          # never exceed the array dim
    else:
        tb = block_rows
    assert tb >= 1 and (tb == B or tb % 8 == 0), \
        "block_rows must be a multiple of 8 (or equal to the batch size)"

    n_blocks = pl.cdiv(B, tb)                   # no jnp.pad copy; tail block
                                                # handled by the in-kernel mask
    kernel = functools.partial(_sbvf_kernel, num_steps=num_steps,
                               res_scale=res_scale, batch=B, block_rows=tb,
                               use_mxu_count=use_mxu_count)

    partials = pl.pallas_call(
        kernel,
        out_shape=jax.ShapeDtypeStruct((n_blocks, 128), jnp.float32),
        grid=(n_blocks,),
        in_specs=[
            pl.BlockSpec((tb, N), lambda i: (i, 0)),
            pl.BlockSpec((tb, N), lambda i: (i, 0)),
        ],
        out_specs=pl.BlockSpec((1, 128), lambda i: (i, 0)),
        compiler_params=pltpu.CompilerParams(
            dimension_semantics=("parallel",),   # independent blocks -> megacore
            vmem_limit_bytes=vmem_limit),
    )(wi, we)
    return jnp.sum(partials[:, 0])


def _reference(wi, we, scale_par=0.3, res_scale=False):
    """Pure-JAX reference mirroring the PyTorch module."""
    res = wi - we
    vals = jnp.abs(res) if res_scale else jnp.abs(wi)
    ivw_sort = -jnp.sort(-vals, axis=1)   # descending sort
    num_steps = math.floor(scale_par * wi.shape[1])
    if num_steps == 0:
        num_steps = 1
    alpha = 1.0 / jnp.mean(ivw_sort[:, 0:num_steps], axis=1)
    return jnp.sum(jnp.square(alpha) * jnp.sum(jnp.square(res), axis=1))


if __name__ == "__main__":
    key = jax.random.PRNGKey(0)

    # Case 1: small shape consistent with the module (batch=4, features=32).
    k1, k2 = jax.random.split(key)
    wi = jax.random.normal(k1, (4, 32), dtype=jnp.float32)
    we = jax.random.normal(k2, (4, 32), dtype=jnp.float32)
    for res_scale in (False, True):
        out = jax.block_until_ready(sbvf_loss(wi, we, 0.3, res_scale))
        ref = _reference(wi, we, 0.3, res_scale)
        assert jnp.allclose(out, ref, rtol=1e-4, atol=1e-5), (res_scale, out, ref)

    # Case 2: batch not a multiple of the row block + multi-block parallel
    # grid with a partial tail block (exercises the padless cdiv grid + mask).
    k3, k4 = jax.random.split(k1)
    wi2 = jax.random.normal(k3, (20, 48), dtype=jnp.float32)
    we2 = jax.random.normal(k4, (20, 48), dtype=jnp.float32)
    out2 = jax.block_until_ready(sbvf_loss(wi2, we2, 0.3, False, block_rows=8))
    ref2 = _reference(wi2, we2, 0.3, False)
    assert jnp.allclose(out2, ref2, rtol=1e-4, atol=1e-5), (out2, ref2)

    # Case 3: exercise both count-reduction code paths explicitly
    # (MXU offload and the VPU/XLU fallback) — both must be exact.
    ref3 = _reference(wi2, we2, 0.3, True)
    out3a = jax.block_until_ready(
        sbvf_loss(wi2, we2, 0.3, True, use_mxu_count=True))
    out3b = jax.block_until_ready(
        sbvf_loss(wi2, we2, 0.3, True, use_mxu_count=False))
    assert jnp.allclose(out3a, ref3, rtol=1e-4, atol=1e-5), (out3a, ref3)
    assert jnp.allclose(out3b, ref3, rtol=1e-4, atol=1e-5), (out3b, ref3)

    print("KERNEL_OK")
</pallas_src>

<mosaic_0001>
module attributes {stable_mosaic.version = 11 : i64} {
  func.func @_sbvf_kernel(%arg0: i32, %arg1: memref<4x32xf32, #tpu.memory_space<vmem>>, %arg2: memref<4x32xf32, #tpu.memory_space<vmem>>, %arg3: memref<1x128xf32, #tpu.memory_space<vmem>>) attributes {dimension_semantics = [#tpu.dimension_semantics<parallel>], iteration_bounds = array<i64: 1>, scalar_prefetch = 0 : i64, scratch_operands = 0 : i64, tpu.core_type = #tpu.core_type<tc>, window_params = [{transform_indices = @transform_0, window_bounds = array<i64: 4, 32>}, {transform_indices = @transform_1, window_bounds = array<i64: 4, 32>}, {transform_indices = @transform_2, window_bounds = array<i64: 1, 128>}]} {
    %c0 = arith.constant 0 : index
    %c0_0 = arith.constant 0 : index
    %0 = vector.load %arg1[%c0, %c0_0] : memref<4x32xf32, #tpu.memory_space<vmem>>, vector<4x32xf32>
    %c0_1 = arith.constant 0 : index
    %c0_2 = arith.constant 0 : index
    %1 = vector.load %arg2[%c0_1, %c0_2] : memref<4x32xf32, #tpu.memory_space<vmem>>, vector<4x32xf32>
    %2 = arith.subf %0, %1 : vector<4x32xf32>
    %3 = arith.mulf %2, %2 : vector<4x32xf32>
    %cst = arith.constant dense<0.000000e+00> : vector<4xf32>
    %4 = vector.multi_reduction <add>, %3, %cst [1] : vector<4x32xf32> to vector<4xf32>
    %5 = vector.shape_cast %4 : vector<4xf32> to vector<4x1xf32>
    %6 = math.absf %0 : vector<4x32xf32>
    %7 = tpu.bitcast %6 : vector<4x32xf32> -> vector<4x32xi32>
    %c0_i32 = arith.constant 0 : i32
    %8 = vector.broadcast %c0_i32 : i32 to vector<4x1xi32>
    %c1073741824_i32 = arith.constant 1073741824 : i32
    %9 = vector.broadcast %c1073741824_i32 : i32 to vector<4x1xi32>
    %10 = arith.ori %8, %9 : vector<4x1xi32>
    %11 = vector.broadcast %10 : vector<4x1xi32> to vector<4x32xi32>
    %12 = arith.cmpi sge, %7, %11 : vector<4x32xi32>
    %cst_3 = arith.constant 1.000000e+00 : f32
    %cst_4 = arith.constant 0.000000e+00 : f32
    %13 = vector.broadcast %cst_3 : f32 to vector<4x32xf32>
    %14 = vector.broadcast %cst_4 : f32 to vector<4x32xf32>
    %15 = arith.select %12, %13, %14 : vector<4x32xi1>, vector<4x32xf32>
    %cst_5 = arith.constant dense<0.000000e+00> : vector<4xf32>
    %16 = vector.multi_reduction <add>, %15, %cst_5 [1] : vector<4x32xf32> to vector<4xf32>
    %17 = vector.shape_cast %16 : vector<4xf32> to vector<4x1xf32>
    %cst_6 = arith.constant 9.000000e+00 : f32
    %18 = vector.broadcast %cst_6 : f32 to vector<4x1xf32>
    %19 = arith.cmpf oge, %17, %18 : vector<4x1xf32>
    %20 = arith.select %19, %10, %8 : vector<4x1xi1>, vector<4x1xi32>
    %c536870912_i32 = arith.constant 536870912 : i32
    %21 = vector.broadcast %c536870912_i32 : i32 to vector<4x1xi32>
    %22 = arith.ori %20, %21 : vector<4x1xi32>
    %23 = vector.broadcast %22 : vector<4x1xi32> to vector<4x32xi32>
    %24 = arith.cmpi sge, %7, %23 : vector<4x32xi32>
    %cst_7 = arith.constant 1.000000e+00 : f32
    %cst_8 = arith.constant 0.000000e+00 : f32
    %25 = vector.broadcast %cst_7 : f32 to vector<4x32xf32>
    %26 = vector.broadcast %cst_8 : f32 to vector<4x32xf32>
    %27 = arith.select %24, %25, %26 : vector<4x32xi1>, vector<4x32xf32>
    %cst_9 = arith.constant dense<0.000000e+00> : vector<4xf32>
    %28 = vector.multi_reduction <add>, %27, %cst_9 [1] : vector<4x32xf32> to vector<4xf32>
    %29 = vector.shape_cast %28 : vector<4xf32> to vector<4x1xf32>
    %cst_10 = arith.constant 9.000000e+00 : f32
    %30 = vector.broadcast %cst_10 : f32 to vector<4x1xf32>
    %31 = arith.cmpf oge, %29, %30 : vector<4x1xf32>
    %32 = arith.select %31, %22, %20 : vector<4x1xi1>, vector<4x1xi32>
    %c268435456_i32 = arith.constant 268435456 : i32
    %33 = vector.broadcast %c268435456_i32 : i32 to vector<4x1xi32>
    %34 = arith.ori %32, %33 : vector<4x1xi32>
    %35 = vector.broadcast %34 : vector<4x1xi32> to vector<4x32xi32>
    %36 = arith.cmpi sge, %7, %35 : vector<4x32xi32>
    %cst_11 = arith.constant 1.000000e+00 : f32
    %cst_12 = arith.constant 0.000000e+00 : f32
    %37 = vector.broadcast %cst_11 : f32 to vector<4x32xf32>
    %38 = vector.broadcast %cst_12 : f32 to vector<4x32xf32>
    %39 = arith.select %36, %37, %38 : vector<4x32xi1>, vector<4x32xf32>
    %cst_13 = arith.constant dense<0.000000e+00> : vector<4xf32>
    %40 = vector.multi_reduction <add>, %39, %cst_13 [1] : vector<4x32xf32> to vector<4xf32>
    %41 = vector.shape_cast %40 : vector<4xf32> to vector<4x1xf32>
    %cst_14 = arith.constant 9.000000e+00 : f32
    %42 = vector.broadcast %cst_14 : f32 to vector<4x1xf32>
    %43 = arith.cmpf oge, %41, %42 : vector<4x1xf32>
    %44 = arith.select %43, %34, %32 : vector<4x1xi1>, vector<4x1xi32>
    %c134217728_i32 = arith.constant 134217728 : i32
    %45 = vector.broadcast %c134217728_i32 : i32 to vector<4x1xi32>
    %46 = arith.ori %44, %45 : vector<4x1xi32>
    %47 = vector.broadcast %46 : vector<4x1xi32> to vector<4x32xi32>
    %48 = arith.cmpi sge, %7, %47 : vector<4x32xi32>
    %cst_15 = arith.constant 1.000000e+00 : f32
    %cst_16 = arith.constant 0.000000e+00 : f32
    %49 = vector.broadcast %cst_15 : f32 to vector<4x32xf32>
    %50 = vector.broadcast %cst_16 : f32 to vector<4x32xf32>
    %51 = arith.select %48, %49, %50 : vector<4x32xi1>, vector<4x32xf32>
    %cst_17 = arith.constant dense<0.000000e+00> : vector<4xf32>
    %52 = vector.multi_reduction <add>, %51, %cst_17 [1] : vector<4x32xf32> to vector<4xf32>
    %53 = vector.shape_cast %52 : vector<4xf32> to vector<4x1xf32>
    %cst_18 = arith.constant 9.000000e+00 : f32
    %54 = vector.broadcast %cst_18 : f32 to vector<4x1xf32>
    %55 = arith.cmpf oge, %53, %54 : vector<4x1xf32>
    %56 = arith.select %55, %46, %44 : vector<4x1xi1>, vector<4x1xi32>
    %c67108864_i32 = arith.constant 67108864 : i32
    %57 = vector.broadcast %c67108864_i32 : i32 to vector<4x1xi32>
    %58 = arith.ori %56, %57 : vector<4x1xi32>
    %59 = vector.broadcast %58 : vector<4x1xi32> to vector<4x32xi32>
    %60 = arith.cmpi sge, %7, %59 : vector<4x32xi32>
    %cst_19 = arith.constant 1.000000e+00 : f32
    %cst_20 = arith.constant 0.000000e+00 : f32
    %61 = vector.broadcast %cst_19 : f32 to vector<4x32xf32>
    %62 = vector.broadcast %cst_20 : f32 to vector<4x32xf32>
    %63 = arith.select %60, %61, %62 : vector<4x32xi1>, vector<4x32xf32>
    %cst_21 = arith.constant dense<0.000000e+00> : vector<4xf32>
    %64 = vector.multi_reduction <add>, %63, %cst_21 [1] : vector<4x32xf32> to vector<4xf32>
    %65 = vector.shape_cast %64 : vector<4xf32> to vector<4x1xf32>
    %cst_22 = arith.constant 9.000000e+00 : f32
    %66 = vector.broadcast %cst_22 : f32 to vector<4x1xf32>
    %67 = arith.cmpf oge, %65, %66 : vector<4x1xf32>
    %68 = arith.select %67, %58, %56 : vector<4x1xi1>, vector<4x1xi32>
    %c33554432_i32 = arith.constant 33554432 : i32
    %69 = vector.broadcast %c33554432_i32 : i32 to vector<4x1xi32>
    %70 = arith.ori %68, %69 : vector<4x1xi32>
    %71 = vector.broadcast %70 : vector<4x1xi32> to vector<4x32xi32>
    %72 = arith.cmpi sge, %7, %71 : vector<4x32xi32>
    %cst_23 = arith.constant 1.000000e+00 : f32
    %cst_24 = arith.constant 0.000000e+00 : f32
    %73 = vector.broadcast %cst_23 : f32 to vector<4x32xf32>
    %74 = vector.broadcast %cst_24 : f32 to vector<4x32xf32>
    %75 = arith.select %72, %73, %74 : vector<4x32xi1>, vector<4x32xf32>
    %cst_25 = arith.constant dense<0.000000e+00> : vector<4xf32>
    %76 = vector.multi_reduction <add>, %75, %cst_25 [1] : vector<4x32xf32> to vector<4xf32>
    %77 = vector.shape_cast %76 : vector<4xf32> to vector<4x1xf32>
    %cst_26 = arith.constant 9.000000e+00 : f32
    %78 = vector.broadcast %cst_26 : f32 to vector<4x1xf32>
    %79 = arith.cmpf oge, %77, %78 : vector<4x1xf32>
    %80 = arith.select %79, %70, %68 : vector<4x1xi1>, vector<4x1xi32>
    %c16777216_i32 = arith.constant 16777216 : i32
    %81 = vector.broadcast %c16777216_i32 : i32 to vector<4x1xi32>
    %82 = arith.ori %80, %81 : vector<4x1xi32>
    %83 = vector.broadcast %82 : vector<4x1xi32> to vector<4x32xi32>
    %84 = arith.cmpi sge, %7, %83 : vector<4x32xi32>
    %cst_27 = arith.constant 1.000000e+00 : f32
    %cst_28 = arith.constant 0.000000e+00 : f32
    %85 = vector.broadcast %cst_27 : f32 to vector<4x32xf32>
    %86 = vector.broadcast %cst_28 : f32 to vector<4x32xf32>
    %87 = arith.select %84, %85, %86 : vector<4x32xi1>, vector<4x32xf32>
    %cst_29 = arith.constant dense<0.000000e+00> : vector<4xf32>
    %88 = vector.multi_reduction <add>, %87, %cst_29 [1] : vector<4x32xf32> to vector<4xf32>
    %89 = vector.shape_cast %88 : vector<4xf32> to vector<4x1xf32>
    %cst_30 = arith.constant 9.000000e+00 : f32
    %90 = vector.broadcast %cst_30 : f32 to vector<4x1xf32>
    %91 = arith.cmpf oge, %89, %90 : vector<4x1xf32>
    %92 = arith.select %91, %82, %80 : vector<4x1xi1>, vector<4x1xi32>
    %c8388608_i32 = arith.constant 8388608 : i32
    %93 = vector.broadcast %c8388608_i32 : i32 to vector<4x1xi32>
    %94 = arith.ori %92, %93 : vector<4x1xi32>
    %95 = vector.broadcast %94 : vector<4x1xi32> to vector<4x32xi32>
    %96 = arith.cmpi sge, %7, %95 : vector<4x32xi32>
    %cst_31 = arith.constant 1.000000e+00 : f32
    %cst_32 = arith.constant 0.000000e+00 : f32
    %97 = vector.broadcast %cst_31 : f32 to vector<4x32xf32>
    %98 = vector.broadcast %cst_32 : f32 to vector<4x32xf32>
    %99 = arith.select %96, %97, %98 : vector<4x32xi1>, vector<4x32xf32>
    %cst_33 = arith.constant dense<0.000000e+00> : vector<4xf32>
    %100 = vector.multi_reduction <add>, %99, %cst_33 [1] : vector<4x32xf32> to vector<4xf32>
    %101 = vector.shape_cast %100 : vector<4xf32> to vector<4x1xf32>
    %cst_34 = arith.constant 9.000000e+00 : f32
    %102 = vector.broadcast %cst_34 : f32 to vector<4x1xf32>
    %103 = arith.cmpf oge, %101, %102 : vector<4x1xf32>
    %104 = arith.select %103, %94, %92 : vector<4x1xi1>, vector<4x1xi32>
    %c4194304_i32 = arith.constant 4194304 : i32
    %105 = vector.broadcast %c4194304_i32 : i32 to vector<4x1xi32>
    %106 = arith.ori %104, %105 : vector<4x1xi32>
    %107 = vector.broadcast %106 : vector<4x1xi32> to vector<4x32xi32>
    %108 = arith.cmpi sge, %7, %107 : vector<4x32xi32>
    %cst_35 = arith.constant 1.000000e+00 : f32
    %cst_36 = arith.constant 0.000000e+00 : f32
    %109 = vector.broadcast %cst_35 : f32 to vector<4x32xf32>
    %110 = vector.broadcast %cst_36 : f32 to vector<4x32xf32>
    %111 = arith.select %108, %109, %110 : vector<4x32xi1>, vector<4x32xf32>
    %cst_37 = arith.constant dense<0.000000e+00> : vector<4xf32>
    %112 = vector.multi_reduction <add>, %111, %cst_37 [1] : vector<4x32xf32> to vector<4xf32>
    %113 = vector.shape_cast %112 : vector<4xf32> to vector<4x1xf32>
    %cst_38 = arith.constant 9.000000e+00 : f32
    %114 = vector.broadcast %cst_38 : f32 to vector<4x1xf32>
    %115 = arith.cmpf oge, %113, %114 : vector<4x1xf32>
    %116 = arith.select %115, %106, %104 : vector<4x1xi1>, vector<4x1xi32>
    %c2097152_i32 = arith.constant 2097152 : i32
    %117 = vector.broadcast %c2097152_i32 : i32 to vector<4x1xi32>
    %118 = arith.ori %116, %117 : vector<4x1xi32>
    %119 = vector.broadcast %118 : vector<4x1xi32> to vector<4x32xi32>
    %120 = arith.cmpi sge, %7, %119 : vector<4x32xi32>
    %cst_39 = arith.constant 1.000000e+00 : f32
    %cst_40 = arith.constant 0.000000e+00 : f32
    %121 = vector.broadcast %cst_39 : f32 to vector<4x32xf32>
    %122 = vector.broadcast %cst_40 : f32 to vector<4x32xf32>
    %123 = arith.select %120, %121, %122 : vector<4x32xi1>, vector<4x32xf32>
    %cst_41 = arith.constant dense<0.000000e+00> : vector<4xf32>
    %124 = vector.multi_reduction <add>, %123, %cst_41 [1] : vector<4x32xf32> to vector<4xf32>
    %125 = vector.shape_cast %124 : vector<4xf32> to vector<4x1xf32>
    %cst_42 = arith.constant 9.000000e+00 : f32
    %126 = vector.broadcast %cst_42 : f32 to vector<4x1xf32>
    %127 = arith.cmpf oge, %125, %126 : vector<4x1xf32>
    %128 = arith.select %127, %118, %116 : vector<4x1xi1>, vector<4x1xi32>
    %c1048576_i32 = arith.constant 1048576 : i32
    %129 = vector.broadcast %c1048576_i32 : i32 to vector<4x1xi32>
    %130 = arith.ori %128, %129 : vector<4x1xi32>
    %131 = vector.broadcast %130 : vector<4x1xi32> to vector<4x32xi32>
    %132 = arith.cmpi sge, %7, %131 : vector<4x32xi32>
    %cst_43 = arith.constant 1.000000e+00 : f32
    %cst_44 = arith.constant 0.000000e+00 : f32
    %133 = vector.broadcast %cst_43 : f32 to vector<4x32xf32>
    %134 = vector.broadcast %cst_44 : f32 to vector<4x32xf32>
    %135 = arith.select %132, %133, %134 : vector<4x32xi1>, vector<4x32xf32>
    %cst_45 = arith.constant dense<0.000000e+00> : vector<4xf32>
    %136 = vector.multi_reduction <add>, %135, %cst_45 [1] : vector<4x32xf32> to vector<4xf32>
    %137 = vector.shape_cast %136 : vector<4xf32> to vector<4x1xf32>
    %cst_46 = arith.constant 9.000000e+00 : f32
    %138 = vector.broadcast %cst_46 : f32 to vector<4x1xf32>
    %139 = arith.cmpf oge, %137, %138 : vector<4x1xf32>
    %140 = arith.select %139, %130, %128 : vector<4x1xi1>, vector<4x1xi32>
    %c524288_i32 = arith.constant 524288 : i32
    %141 = vector.broadcast %c524288_i32 : i32 to vector<4x1xi32>
    %142 = arith.ori %140, %141 : vector<4x1xi32>
    %143 = vector.broadcast %142 : vector<4x1xi32> to vector<4x32xi32>
    %144 = arith.cmpi sge, %7, %143 : vector<4x32xi32>
    %cst_47 = arith.constant 1.000000e+00 : f32
    %cst_48 = arith.constant 0.000000e+00 : f32
    %145 = vector.broadcast %cst_47 : f32 to vector<4x32xf32>
    %146 = vector.broadcast %cst_48 : f32 to vector<4x32xf32>
    %147 = arith.select %144, %145, %146 : vector<4x32xi1>, vector<4x32xf32>
    %cst_49 = arith.constant dense<0.000000e+00> : vector<4xf32>
    %148 = vector.multi_reduction <add>, %147, %cst_49 [1] : vector<4x32xf32> to vector<4xf32>
    %149 = vector.shape_cast %148 : vector<4xf32> to vector<4x1xf32>
    %cst_50 = arith.constant 9.000000e+00 : f32
    %150 = vector.broadcast %cst_50 : f32 to vector<4x1xf32>
    %151 = arith.cmpf oge, %149, %150 : vector<4x1xf32>
    %152 = arith.select %151, %142, %140 : vector<4x1xi1>, vector<4x1xi32>
    %c262144_i32 = arith.constant 262144 : i32
    %153 = vector.broadcast %c262144_i32 : i32 to vector<4x1xi32>
    %154 = arith.ori %152, %153 : vector<4x1xi32>
    %155 = vector.broadcast %154 : vector<4x1xi32> to vector<4x32xi32>
    %156 = arith.cmpi sge, %7, %155 : vector<4x32xi32>
    %cst_51 = arith.constant 1.000000e+00 : f32
    %cst_52 = arith.constant 0.000000e+00 : f32
    %157 = vector.broadcast %cst_51 : f32 to vector<4x32xf32>
    %158 = vector.broadcast %cst_52 : f32 to vector<4x32xf32>
    %159 = arith.select %156, %157, %158 : vector<4x32xi1>, vector<4x32xf32>
    %cst_53 = arith.constant dense<0.000000e+00> : vector<4xf32>
    %160 = vector.multi_reduction <add>, %159, %cst_53 [1] : vector<4x32xf32> to vector<4xf32>
    %161 = vector.shape_cast %160 : vector<4xf32> to vector<4x1xf32>
    %cst_54 = arith.constant 9.000000e+00 : f32
    %162 = vector.broadcast %cst_54 : f32 to vector<4x1xf32>
    %163 = arith.cmpf oge, %161, %162 : vector<4x1xf32>
    %164 = arith.select %163, %154, %152 : vector<4x1xi1>, vector<4x1xi32>
    %c131072_i32 = arith.constant 131072 : i32
    %165 = vector.broadcast %c131072_i32 : i32 to vector<4x1xi32>
    %166 = arith.ori %164, %165 : vector<4x1xi32>
    %167 = vector.broadcast %166 : vector<4x1xi32> to vector<4x32xi32>
    %168 = arith.cmpi sge, %7, %167 : vector<4x32xi32>
    %cst_55 = arith.constant 1.000000e+00 : f32
    %cst_56 = arith.constant 0.000000e+00 : f32
    %169 = vector.broadcast %cst_55 : f32 to vector<4x32xf32>
    %170 = vector.broadcast %cst_56 : f32 to vector<4x32xf32>
    %171 = arith.select %168, %169, %170 : vector<4x32xi1>, vector<4x32xf32>
    %cst_57 = arith.constant dense<0.000000e+00> : vector<4xf32>
    %172 = vector.multi_reduction <add>, %171, %cst_57 [1] : vector<4x32xf32> to vector<4xf32>
    %173 = vector.shape_cast %172 : vector<4xf32> to vector<4x1xf32>
    %cst_58 = arith.constant 9.000000e+00 : f32
    %174 = vector.broadcast %cst_58 : f32 to vector<4x1xf32>
    %175 = arith.cmpf oge, %173, %174 : vector<4x1xf32>
    %176 = arith.select %175, %166, %164 : vector<4x1xi1>, vector<4x1xi32>
    %c65536_i32 = arith.constant 65536 : i32
    %177 = vector.broadcast %c65536_i32 : i32 to vector<4x1xi32>
    %178 = arith.ori %176, %177 : vector<4x1xi32>
    %179 = vector.broadcast %178 : vector<4x1xi32> to vector<4x32xi32>
    %180 = arith.cmpi sge, %7, %179 : vector<4x32xi32>
    %cst_59 = arith.constant 1.000000e+00 : f32
    %cst_60 = arith.constant 0.000000e+00 : f32
    %181 = vector.broadcast %cst_59 : f32 to vector<4x32xf32>
    %182 = vector.broadcast %cst_60 : f32 to vector<4x32xf32>
    %183 = arith.select %180, %181, %182 : vector<4x32xi1>, vector<4x32xf32>
    %cst_61 = arith.constant dense<0.000000e+00> : vector<4xf32>
    %184 = vector.multi_reduction <add>, %183, %cst_61 [1] : vector<4x32xf32> to vector<4xf32>
    %185 = vector.shape_cast %184 : vector<4xf32> to vector<4x1xf32>
    %cst_62 = arith.constant 9.000000e+00 : f32
    %186 = vector.broadcast %cst_62 : f32 to vector<4x1xf32>
    %187 = arith.cmpf oge, %185, %186 : vector<4x1xf32>
    %188 = arith.select %187, %178, %176 : vector<4x1xi1>, vector<4x1xi32>
    %c32768_i32 = arith.constant 32768 : i32
    %189 = vector.broadcast %c32768_i32 : i32 to vector<4x1xi32>
    %190 = arith.ori %188, %189 : vector<4x1xi32>
    %191 = vector.broadcast %190 : vector<4x1xi32> to vector<4x32xi32>
    %192 = arith.cmpi sge, %7, %191 : vector<4x32xi32>
    %cst_63 = arith.constant 1.000000e+00 : f32
    %cst_64 = arith.constant 0.000000e+00 : f32
    %193 = vector.broadcast %cst_63 : f32 to vector<4x32xf32>
    %194 = vector.broadcast %cst_64 : f32 to vector<4x32xf32>
    %195 = arith.select %192, %193, %194 : vector<4x32xi1>, vector<4x32xf32>
    %cst_65 = arith.constant dense<0.000000e+00> : vector<4xf32>
    %196 = vector.multi_reduction <add>, %195, %cst_65 [1] : vector<4x32xf32> to vector<4xf32>
    %197 = vector.shape_cast %196 : vector<4xf32> to vector<4x1xf32>
    %cst_66 = arith.constant 9.000000e+00 : f32
    %198 = vector.broadcast %cst_66 : f32 to vector<4x1xf32>
    %199 = arith.cmpf oge, %197, %198 : vector<4x1xf32>
    %200 = arith.select %199, %190, %188 : vector<4x1xi1>, vector<4x1xi32>
    %c16384_i32 = arith.constant 16384 : i32
    %201 = vector.broadcast %c16384_i32 : i32 to vector<4x1xi32>
    %202 = arith.ori %200, %201 : vector<4x1xi32>
    %203 = vector.broadcast %202 : vector<4x1xi32> to vector<4x32xi32>
    %204 = arith.cmpi sge, %7, %203 : vector<4x32xi32>
    %cst_67 = arith.constant 1.000000e+00 : f32
    %cst_68 = arith.constant 0.000000e+00 : f32
    %205 = vector.broadcast %cst_67 : f32 to vector<4x32xf32>
    %206 = vector.broadcast %cst_68 : f32 to vector<4x32xf32>
    %207 = arith.select %204, %205, %206 : vector<4x32xi1>, vector<4x32xf32>
    %cst_69 = arith.constant dense<0.000000e+00> : vector<4xf32>
    %208 = vector.multi_reduction <add>, %207, %cst_69 [1] : vector<4x32xf32> to vector<4xf32>
    %209 = vector.shape_cast %208 : vector<4xf32> to vector<4x1xf32>
    %cst_70 = arith.constant 9.000000e+00 : f32
    %210 = vector.broadcast %cst_70 : f32 to vector<4x1xf32>
    %211 = arith.cmpf oge, %209, %210 : vector<4x1xf32>
    %212 = arith.select %211, %202, %200 : vector<4x1xi1>, vector<4x1xi32>
    %c8192_i32 = arith.constant 8192 : i32
    %213 = vector.broadcast %c8192_i32 : i32 to vector<4x1xi32>
    %214 = arith.ori %212, %213 : vector<4x1xi32>
    %215 = vector.broadcast %214 : vector<4x1xi32> to vector<4x32xi32>
    %216 = arith.cmpi sge, %7, %215 : vector<4x32xi32>
    %cst_71 = arith.constant 1.000000e+00 : f32
    %cst_72 = arith.constant 0.000000e+00 : f32
    %217 = vector.broadcast %cst_71 : f32 to vector<4x32xf32>
    %218 = vector.broadcast %cst_72 : f32 to vector<4x32xf32>
    %219 = arith.select %216, %217, %218 : vector<4x32xi1>, vector<4x32xf32>
    %cst_73 = arith.constant dense<0.000000e+00> : vector<4xf32>
    %220 = vector.multi_reduction <add>, %219, %cst_73 [1] : vector<4x32xf32> to vector<4xf32>
    %221 = vector.shape_cast %220 : vector<4xf32> to vector<4x1xf32>
    %cst_74 = arith.constant 9.000000e+00 : f32
    %222 = vector.broadcast %cst_74 : f32 to vector<4x1xf32>
    %223 = arith.cmpf oge, %221, %222 : vector<4x1xf32>
    %224 = arith.select %223, %214, %212 : vector<4x1xi1>, vector<4x1xi32>
    %c4096_i32 = arith.constant 4096 : i32
    %225 = vector.broadcast %c4096_i32 : i32 to vector<4x1xi32>
    %226 = arith.ori %224, %225 : vector<4x1xi32>
    %227 = vector.broadcast %226 : vector<4x1xi32> to vector<4x32xi32>
    %228 = arith.cmpi sge, %7, %227 : vector<4x32xi32>
    %cst_75 = arith.constant 1.000000e+00 : f32
    %cst_76 = arith.constant 0.000000e+00 : f32
    %229 = vector.broadcast %cst_75 : f32 to vector<4x32xf32>
    %230 = vector.broadcast %cst_76 : f32 to vector<4x32xf32>
    %231 = arith.select %228, %229, %230 : vector<4x32xi1>, vector<4x32xf32>
    %cst_77 = arith.constant dense<0.000000e+00> : vector<4xf32>
    %232 = vector.multi_reduction <add>, %231, %cst_77 [1] : vector<4x32xf32> to vector<4xf32>
    %233 = vector.shape_cast %232 : vector<4xf32> to vector<4x1xf32>
    %cst_78 = arith.constant 9.000000e+00 : f32
    %234 = vector.broadcast %cst_78 : f32 to vector<4x1xf32>
    %235 = arith.cmpf oge, %233, %234 : vector<4x1xf32>
    %236 = arith.select %235, %226, %224 : vector<4x1xi1>, vector<4x1xi32>
    %c2048_i32 = arith.constant 2048 : i32
    %237 = vector.broadcast %c2048_i32 : i32 to vector<4x1xi32>
    %238 = arith.ori %236, %237 : vector<4x1xi32>
    %239 = vector.broadcast %238 : vector<4x1xi32> to vector<4x32xi32>
    %240 = arith.cmpi sge, %7, %239 : vector<4x32xi32>
    %cst_79 = arith.constant 1.000000e+00 : f32
    %cst_80 = arith.constant 0.000000e+00 : f32
    %241 = vector.broadcast %cst_79 : f32 to vector<4x32xf32>
    %242 = vector.broadcast %cst_80 : f32 to vector<4x32xf32>
    %243 = arith.select %240, %241, %242 : vector<4x32xi1>, vector<4x32xf32>
    %cst_81 = arith.constant dense<0.000000e+00> : vector<4xf32>
    %244 = vector.multi_reduction <add>, %243, %cst_81 [1] : vector<4x32xf32> to vector<4xf32>
    %245 = vector.shape_cast %244 : vector<4xf32> to vector<4x1xf32>
    %cst_82 = arith.constant 9.000000e+00 : f32
    %246 = vector.broadcast %cst_82 : f32 to vector<4x1xf32>
    %247 = arith.cmpf oge, %245, %246 : vector<4x1xf32>
    %248 = arith.select %247, %238, %236 : vector<4x1xi1>, vector<4x1xi32>
    %c1024_i32 = arith.constant 1024 : i32
    %249 = vector.broadcast %c1024_i32 : i32 to vector<4x1xi32>
    %250 = arith.ori %248, %249 : vector<4x1xi32>
    %251 = vector.broadcast %250 : vector<4x1xi32> to vector<4x32xi32>
    %252 = arith.cmpi sge, %7, %251 : vector<4x32xi32>
    %cst_83 = arith.constant 1.000000e+00 : f32
    %cst_84 = arith.constant 0.000000e+00 : f32
    %253 = vector.broadcast %cst_83 : f32 to vector<4x32xf32>
    %254 = vector.broadcast %cst_84 : f32 to vector<4x32xf32>
    %255 = arith.select %252, %253, %254 : vector<4x32xi1>, vector<4x32xf32>
    %cst_85 = arith.constant dense<0.000000e+00> : vector<4xf32>
    %256 = vector.multi_reduction <add>, %255, %cst_85 [1] : vector<4x32xf32> to vector<4xf32>
    %257 = vector.shape_cast %256 : vector<4xf32> to vector<4x1xf32>
    %cst_86 = arith.constant 9.000000e+00 : f32
    %258 = vector.broadcast %cst_86 : f32 to vector<4x1xf32>
    %259 = arith.cmpf oge, %257, %258 : vector<4x1xf32>
    %260 = arith.select %259, %250, %248 : vector<4x1xi1>, vector<4x1xi32>
    %c512_i32 = arith.constant 512 : i32
    %261 = vector.broadcast %c512_i32 : i32 to vector<4x1xi32>
    %262 = arith.ori %260, %261 : vector<4x1xi32>
    %263 = vector.broadcast %262 : vector<4x1xi32> to vector<4x32xi32>
    %264 = arith.cmpi sge, %7, %263 : vector<4x32xi32>
    %cst_87 = arith.constant 1.000000e+00 : f32
    %cst_88 = arith.constant 0.000000e+00 : f32
    %265 = vector.broadcast %cst_87 : f32 to vector<4x32xf32>
    %266 = vector.broadcast %cst_88 : f32 to vector<4x32xf32>
    %267 = arith.select %264, %265, %266 : vector<4x32xi1>, vector<4x32xf32>
    %cst_89 = arith.constant dense<0.000000e+00> : vector<4xf32>
    %268 = vector.multi_reduction <add>, %267, %cst_89 [1] : vector<4x32xf32> to vector<4xf32>
    %269 = vector.shape_cast %268 : vector<4xf32> to vector<4x1xf32>
    %cst_90 = arith.constant 9.000000e+00 : f32
    %270 = vector.broadcast %cst_90 : f32 to vector<4x1xf32>
    %271 = arith.cmpf oge, %269, %270 : vector<4x1xf32>
    %272 = arith.select %271, %262, %260 : vector<4x1xi1>, vector<4x1xi32>
    %c256_i32 = arith.constant 256 : i32
    %273 = vector.broadcast %c256_i32 : i32 to vector<4x1xi32>
    %274 = arith.ori %272, %273 : vector<4x1xi32>
    %275 = vector.broadcast %274 : vector<4x1xi32> to vector<4x32xi32>
    %276 = arith.cmpi sge, %7, %275 : vector<4x32xi32>
    %cst_91 = arith.constant 1.000000e+00 : f32
    %cst_92 = arith.constant 0.000000e+00 : f32
    %277 = vector.broadcast %cst_91 : f32 to vector<4x32xf32>
    %278 = vector.broadcast %cst_92 : f32 to vector<4x32xf32>
    %279 = arith.select %276, %277, %278 : vector<4x32xi1>, vector<4x32xf32>
    %cst_93 = arith.constant dense<0.000000e+00> : vector<4xf32>
    %280 = vector.multi_reduction <add>, %279, %cst_93 [1] : vector<4x32xf32> to vector<4xf32>
    %281 = vector.shape_cast %280 : vector<4xf32> to vector<4x1xf32>
    %cst_94 = arith.constant 9.000000e+00 : f32
    %282 = vector.broadcast %cst_94 : f32 to vector<4x1xf32>
    %283 = arith.cmpf oge, %281, %282 : vector<4x1xf32>
    %284 = arith.select %283, %274, %272 : vector<4x1xi1>, vector<4x1xi32>
    %c128_i32 = arith.constant 128 : i32
    %285 = vector.broadcast %c128_i32 : i32 to vector<4x1xi32>
    %286 = arith.ori %284, %285 : vector<4x1xi32>
    %287 = vector.broadcast %286 : vector<4x1xi32> to vector<4x32xi32>
    %288 = arith.cmpi sge, %7, %287 : vector<4x32xi32>
    %cst_95 = arith.constant 1.000000e+00 : f32
    %cst_96 = arith.constant 0.000000e+00 : f32
    %289 = vector.broadcast %cst_95 : f32 to vector<4x32xf32>
    %290 = vector.broadcast %cst_96 : f32 to vector<4x32xf32>
    %291 = arith.select %288, %289, %290 : vector<4x32xi1>, vector<4x32xf32>
    %cst_97 = arith.constant dense<0.000000e+00> : vector<4xf32>
    %292 = vector.multi_reduction <add>, %291, %cst_97 [1] : vector<4x32xf32> to vector<4xf32>
    %293 = vector.shape_cast %292 : vector<4xf32> to vector<4x1xf32>
    %cst_98 = arith.constant 9.000000e+00 : f32
    %294 = vector.broadcast %cst_98 : f32 to vector<4x1xf32>
    %295 = arith.cmpf oge, %293, %294 : vector<4x1xf32>
    %296 = arith.select %295, %286, %284 : vector<4x1xi1>, vector<4x1xi32>
    %c64_i32 = arith.constant 64 : i32
    %297 = vector.broadcast %c64_i32 : i32 to vector<4x1xi32>
    %298 = arith.ori %296, %297 : vector<4x1xi32>
    %299 = vector.broadcast %298 : vector<4x1xi32> to vector<4x32xi32>
    %300 = arith.cmpi sge, %7, %299 : vector<4x32xi32>
    %cst_99 = arith.constant 1.000000e+00 : f32
    %cst_100 = arith.constant 0.000000e+00 : f32
    %301 = vector.broadcast %cst_99 : f32 to vector<4x32xf32>
    %302 = vector.broadcast %cst_100 : f32 to vector<4x32xf32>
    %303 = arith.select %300, %301, %302 : vector<4x32xi1>, vector<4x32xf32>
    %cst_101 = arith.constant dense<0.000000e+00> : vector<4xf32>
    %304 = vector.multi_reduction <add>, %303, %cst_101 [1] : vector<4x32xf32> to vector<4xf32>
    %305 = vector.shape_cast %304 : vector<4xf32> to vector<4x1xf32>
    %cst_102 = arith.constant 9.000000e+00 : f32
    %306 = vector.broadcast %cst_102 : f32 to vector<4x1xf32>
    %307 = arith.cmpf oge, %305, %306 : vector<4x1xf32>
    %308 = arith.select %307, %298, %296 : vector<4x1xi1>, vector<4x1xi32>
    %c32_i32 = arith.constant 32 : i32
    %309 = vector.broadcast %c32_i32 : i32 to vector<4x1xi32>
    %310 = arith.ori %308, %309 : vector<4x1xi32>
    %311 = vector.broadcast %310 : vector<4x1xi32> to vector<4x32xi32>
    %312 = arith.cmpi sge, %7, %311 : vector<4x32xi32>
    %cst_103 = arith.constant 1.000000e+00 : f32
    %cst_104 = arith.constant 0.000000e+00 : f32
    %313 = vector.broadcast %cst_103 : f32 to vector<4x32xf32>
    %314 = vector.broadcast %cst_104 : f32 to vector<4x32xf32>
    %315 = arith.select %312, %313, %314 : vector<4x32xi1>, vector<4x32xf32>
    %cst_105 = arith.constant dense<0.000000e+00> : vector<4xf32>
    %316 = vector.multi_reduction <add>, %315, %cst_105 [1] : vector<4x32xf32> to vector<4xf32>
    %317 = vector.shape_cast %316 : vector<4xf32> to vector<4x1xf32>
    %cst_106 = arith.constant 9.000000e+00 : f32
    %318 = vector.broadcast %cst_106 : f32 to vector<4x1xf32>
    %319 = arith.cmpf oge, %317, %318 : vector<4x1xf32>
    %320 = arith.select %319, %310, %308 : vector<4x1xi1>, vector<4x1xi32>
    %c16_i32 = arith.constant 16 : i32
    %321 = vector.broadcast %c16_i32 : i32 to vector<4x1xi32>
    %322 = arith.ori %320, %321 : vector<4x1xi32>
    %323 = vector.broadcast %322 : vector<4x1xi32> to vector<4x32xi32>
    %324 = arith.cmpi sge, %7, %323 : vector<4x32xi32>
    %cst_107 = arith.constant 1.000000e+00 : f32
    %cst_108 = arith.constant 0.000000e+00 : f32
    %325 = vector.broadcast %cst_107 : f32 to vector<4x32xf32>
    %326 = vector.broadcast %cst_108 : f32 to vector<4x32xf32>
    %327 = arith.select %324, %325, %326 : vector<4x32xi1>, vector<4x32xf32>
    %cst_109 = arith.constant dense<0.000000e+00> : vector<4xf32>
    %328 = vector.multi_reduction <add>, %327, %cst_109 [1] : vector<4x32xf32> to vector<4xf32>
    %329 = vector.shape_cast %328 : vector<4xf32> to vector<4x1xf32>
    %cst_110 = arith.constant 9.000000e+00 : f32
    %330 = vector.broadcast %cst_110 : f32 to vector<4x1xf32>
    %331 = arith.cmpf oge, %329, %330 : vector<4x1xf32>
    %332 = arith.select %331, %322, %320 : vector<4x1xi1>, vector<4x1xi32>
    %c8_i32 = arith.constant 8 : i32
    %333 = vector.broadcast %c8_i32 : i32 to vector<4x1xi32>
    %334 = arith.ori %332, %333 : vector<4x1xi32>
    %335 = vector.broadcast %334 : vector<4x1xi32> to vector<4x32xi32>
    %336 = arith.cmpi sge, %7, %335 : vector<4x32xi32>
    %cst_111 = arith.constant 1.000000e+00 : f32
    %cst_112 = arith.constant 0.000000e+00 : f32
    %337 = vector.broadcast %cst_111 : f32 to vector<4x32xf32>
    %338 = vector.broadcast %cst_112 : f32 to vector<4x32xf32>
    %339 = arith.select %336, %337, %338 : vector<4x32xi1>, vector<4x32xf32>
    %cst_113 = arith.constant dense<0.000000e+00> : vector<4xf32>
    %340 = vector.multi_reduction <add>, %339, %cst_113 [1] : vector<4x32xf32> to vector<4xf32>
    %341 = vector.shape_cast %340 : vector<4xf32> to vector<4x1xf32>
    %cst_114 = arith.constant 9.000000e+00 : f32
    %342 = vector.broadcast %cst_114 : f32 to vector<4x1xf32>
    %343 = arith.cmpf oge, %341, %342 : vector<4x1xf32>
    %344 = arith.select %343, %334, %332 : vector<4x1xi1>, vector<4x1xi32>
    %c4_i32 = arith.constant 4 : i32
    %345 = vector.broadcast %c4_i32 : i32 to vector<4x1xi32>
    %346 = arith.ori %344, %345 : vector<4x1xi32>
    %347 = vector.broadcast %346 : vector<4x1xi32> to vector<4x32xi32>
    %348 = arith.cmpi sge, %7, %347 : vector<4x32xi32>
    %cst_115 = arith.constant 1.000000e+00 : f32
    %cst_116 = arith.constant 0.000000e+00 : f32
    %349 = vector.broadcast %cst_115 : f32 to vector<4x32xf32>
    %350 = vector.broadcast %cst_116 : f32 to vector<4x32xf32>
    %351 = arith.select %348, %349, %350 : vector<4x32xi1>, vector<4x32xf32>
    %cst_117 = arith.constant dense<0.000000e+00> : vector<4xf32>
    %352 = vector.multi_reduction <add>, %351, %cst_117 [1] : vector<4x32xf32> to vector<4xf32>
    %353 = vector.shape_cast %352 : vector<4xf32> to vector<4x1xf32>
    %cst_118 = arith.constant 9.000000e+00 : f32
    %354 = vector.broadcast %cst_118 : f32 to vector<4x1xf32>
    %355 = arith.cmpf oge, %353, %354 : vector<4x1xf32>
    %356 = arith.select %355, %346, %344 : vector<4x1xi1>, vector<4x1xi32>
    %c2_i32 = arith.constant 2 : i32
    %357 = vector.broadcast %c2_i32 : i32 to vector<4x1xi32>
    %358 = arith.ori %356, %357 : vector<4x1xi32>
    %359 = vector.broadcast %358 : vector<4x1xi32> to vector<4x32xi32>
    %360 = arith.cmpi sge, %7, %359 : vector<4x32xi32>
    %cst_119 = arith.constant 1.000000e+00 : f32
    %cst_120 = arith.constant 0.000000e+00 : f32
    %361 = vector.broadcast %cst_119 : f32 to vector<4x32xf32>
    %362 = vector.broadcast %cst_120 : f32 to vector<4x32xf32>
    %363 = arith.select %360, %361, %362 : vector<4x32xi1>, vector<4x32xf32>
    %cst_121 = arith.constant dense<0.000000e+00> : vector<4xf32>
    %364 = vector.multi_reduction <add>, %363, %cst_121 [1] : vector<4x32xf32> to vector<4xf32>
    %365 = vector.shape_cast %364 : vector<4xf32> to vector<4x1xf32>
    %cst_122 = arith.constant 9.000000e+00 : f32
    %366 = vector.broadcast %cst_122 : f32 to vector<4x1xf32>
    %367 = arith.cmpf oge, %365, %366 : vector<4x1xf32>
    %368 = arith.select %367, %358, %356 : vector<4x1xi1>, vector<4x1xi32>
    %c1_i32 = arith.constant 1 : i32
    %369 = vector.broadcast %c1_i32 : i32 to vector<4x1xi32>
    %370 = arith.ori %368, %369 : vector<4x1xi32>
    %371 = vector.broadcast %370 : vector<4x1xi32> to vector<4x32xi32>
    %372 = arith.cmpi sge, %7, %371 : vector<4x32xi32>
    %cst_123 = arith.constant 1.000000e+00 : f32
    %cst_124 = arith.constant 0.000000e+00 : f32
    %373 = vector.broadcast %cst_123 : f32 to vector<4x32xf32>
    %374 = vector.broadcast %cst_124 : f32 to vector<4x32xf32>
    %375 = arith.select %372, %373, %374 : vector<4x32xi1>, vector<4x32xf32>
    %cst_125 = arith.constant dense<0.000000e+00> : vector<4xf32>
    %376 = vector.multi_reduction <add>, %375, %cst_125 [1] : vector<4x32xf32> to vector<4xf32>
    %377 = vector.shape_cast %376 : vector<4xf32> to vector<4x1xf32>
    %cst_126 = arith.constant 9.000000e+00 : f32
    %378 = vector.broadcast %cst_126 : f32 to vector<4x1xf32>
    %379 = arith.cmpf oge, %377, %378 : vector<4x1xf32>
    %380 = arith.select %379, %370, %368 : vector<4x1xi1>, vector<4x1xi32>
    %381 = vector.broadcast %380 : vector<4x1xi32> to vector<4x32xi32>
    %382 = arith.cmpi sgt, %7, %381 : vector<4x32xi32>
    %cst_127 = arith.constant 1.000000e+00 : f32
    %cst_128 = arith.constant 0.000000e+00 : f32
    %383 = vector.broadcast %cst_127 : f32 to vector<4x32xf32>
    %384 = vector.broadcast %cst_128 : f32 to vector<4x32xf32>
    %385 = arith.select %382, %383, %384 : vector<4x32xi1>, vector<4x32xf32>
    %cst_129 = arith.constant dense<0.000000e+00> : vector<4xf32>
    %386 = vector.multi_reduction <add>, %385, %cst_129 [1] : vector<4x32xf32> to vector<4xf32>
    %387 = vector.shape_cast %386 : vector<4xf32> to vector<4x1xf32>
    %cst_130 = arith.constant 0.000000e+00 : f32
    %388 = vector.broadcast %cst_130 : f32 to vector<4x32xf32>
    %389 = arith.select %382, %6, %388 : vector<4x32xi1>, vector<4x32xf32>
    %cst_131 = arith.constant dense<0.000000e+00> : vector<4xf32>
    %390 = vector.multi_reduction <add>, %389, %cst_131 [1] : vector<4x32xf32> to vector<4xf32>
    %391 = vector.shape_cast %390 : vector<4xf32> to vector<4x1xf32>
    %392 = tpu.bitcast %380 : vector<4x1xi32> -> vector<4x1xf32>
    %cst_132 = arith.constant 9.000000e+00 : f32
    %393 = vector.broadcast %cst_132 : f32 to vector<4x1xf32>
    %394 = arith.subf %393, %387 : vector<4x1xf32>
    %395 = arith.mulf %394, %392 : vector<4x1xf32>
    %396 = arith.addf %391, %395 : vector<4x1xf32>
    %c4_i32_133 = arith.constant 4 : i32
    %397 = arith.muli %arg0, %c4_i32_133 : i32
    %398 = tpu.iota {dimensions = array<i32: 0>} : vector<4x1xi32>
    %399 = vector.broadcast %397 : i32 to vector<4x1xi32>
    %400 = arith.addi %399, %398 : vector<4x1xi32>
    %c4_i32_134 = arith.constant 4 : i32
    %401 = vector.broadcast %c4_i32_134 : i32 to vector<4x1xi32>
    %402 = arith.cmpi slt, %400, %401 : vector<4x1xi32>
    %cst_135 = arith.constant 1.000000e+00 : f32
    %403 = vector.broadcast %cst_135 : f32 to vector<4x1xf32>
    %404 = arith.select %402, %396, %403 : vector<4x1xi1>, vector<4x1xf32>
    %405 = tpu.reciprocal %404 : vector<4x1xf32> -> vector<4x1xf32>
    %cst_136 = arith.constant 9.000000e+00 : f32
    %406 = vector.broadcast %cst_136 : f32 to vector<4x1xf32>
    %407 = arith.mulf %406, %405 : vector<4x1xf32>
    %408 = arith.mulf %407, %407 : vector<4x1xf32>
    %409 = arith.mulf %408, %5 : vector<4x1xf32>
    %cst_137 = arith.constant 0.000000e+00 : f32
    %410 = vector.broadcast %cst_137 : f32 to vector<4x1xf32>
    %411 = arith.select %402, %409, %410 : vector<4x1xi1>, vector<4x1xf32>
    %cst_138 = arith.constant dense<0.000000e+00> : vector<1xf32>
    %412 = vector.multi_reduction <add>, %411, %cst_138 [0] : vector<4x1xf32> to vector<1xf32>
    %413 = vector.shape_cast %412 : vector<1xf32> to vector<1x1xf32>
    %414 = vector.shape_cast %413 : vector<1x1xf32> to vector<1x1xf32>
    %415 = vector.broadcast %414 : vector<1x1xf32> to vector<1x128xf32>
    %c0_139 = arith.constant 0 : index
    %c0_140 = arith.constant 0 : index
    %416 = vector.load %arg3[%c0_139, %c0_140] : memref<1x128xf32, #tpu.memory_space<vmem>>, vector<1x128xf32>
    tpu.vector_store %arg3[%c0_139, %c0_140], %415 {strides = array<i32>} : memref<1x128xf32, #tpu.memory_space<vmem>>, vector<1x128xf32>,
    return
  }
  func.func @transform_0(%arg0: i32) -> (i32, i32) {
    %c0_i32 = arith.constant 0 : i32
    %c0_i32_0 = arith.constant 0 : i32
    return %arg0, %c0_i32 : i32, i32
  }
  func.func @transform_1(%arg0: i32) -> (i32, i32) {
    %c0_i32 = arith.constant 0 : i32
    %c0_i32_0 = arith.constant 0 : i32
    return %arg0, %c0_i32 : i32, i32
  }
  func.func @transform_2(%arg0: i32) -> (i32, i32) {
    %c0_i32 = arith.constant 0 : i32
    %c0_i32_0 = arith.constant 0 : i32
    return %arg0, %c0_i32 : i32, i32
  }
}

</mosaic_0001>

<llo_original>
// kernel: tpu_custom_call.1
$region0: #{tpu_custom_call.1}
  #allocation0 [shape = 'u32[]', space=smem, size = 0x4, offset = 0x4, fixed_abs, tag = 'smem constant byte address 0x4 - core index']
  #allocation1 [shape = 'u32[144,128]{1,0:T(1,128)}', space=vmem, size = 0x12000, scoped, tag = 'internal scratch']
  %s0 = inlined_call_operand.hbm [shape: f32[4,32], index: 0, kind: input, shape index: {}]
  %s1 = inlined_call_operand.hbm [shape: f32[4,32], index: 1, kind: input, shape index: {}]
  %s2 = inlined_call_operand.hbm [shape: f32[1,128], index: 2, kind: output, shape index: {}]
  %s3 = sld [smem:[#allocation0]]
  $region26: #{tpu_custom_call.1} parent=0
    _
  %s5 = ssub.s32 1, %s3
  %s6 = scalar_select 0, %s5, %s3
  $region1: #{tpu_custom_call.1} parent=0
    #allocation2 [shape = 'u8[2048]{0}', space=vmem, size = 0x800, scoped, tag = 'input window, operand 0, single buffered']
    #allocation3 [shape = 's32[1]{0}', space=sflag, size = 0x4, scoped, tag = 'scoped memory for tpu_custom_call.1']
    #allocation4 [shape = 's32[1]{0}', space=sflag, size = 0x4, scoped, tag = 'scoped memory for tpu_custom_call.1']
    #allocation5 [shape = 'u8[2048]{0}', space=vmem, size = 0x800, scoped, tag = 'input window, operand 1, single buffered']
    #allocation6 [shape = 's32[1]{0}', space=sflag, size = 0x4, scoped, tag = 'scoped memory for tpu_custom_call.1']
    #allocation7 [shape = 'u8[512]{0}', space=vmem, size = 0x400, scoped, tag = 'output window, operand 0, single buffered']
    %7 = vsyncpa [#allocation3], 0
    %8 = vsyncpa [#allocation6], 0
    %9 = vsyncpa [#allocation4], 0
    // Predicated region
    $region2: #{tpu_custom_call.1} parent=1 // pred_check
      _
    $region3: #{tpu_custom_call.1} parent=1 // pred_check_branch
      %11 = sbr.rel (0) target = $region5
    $region4: #{tpu_custom_call.1} parent=1 // pred_region
      %s13 = ssub.s32 64, 64
      %14 = vsyncadd [#allocation3], %s13
      %s16 = sshll.u32 [#allocation2], 4
      %s17 = int_to_ptr.vmem [resolvable:$true] %s16
      %19 = dma.hbm_to_vmem [thread:$0]  %s0, 64, %s17, [#allocation3]
    $region5: #{tpu_custom_call.1} parent=1 // pred_fallthru
      _
    // Predicated region
    $region6: #{tpu_custom_call.1} parent=1 // pred_check
      _
    $region7: #{tpu_custom_call.1} parent=1 // pred_check_branch
      %21 = sbr.rel (0) target = $region9
    $region8: #{tpu_custom_call.1} parent=1 // pred_region
      %s23 = ssub.s32 64, 64
      %24 = vsyncadd [#allocation6], %s23
      %s26 = sshll.u32 [#allocation5], 4
      %s27 = int_to_ptr.vmem [resolvable:$true] %s26
      %29 = dma.hbm_to_vmem [thread:$0]  %s1, 64, %s27, [#allocation6]
    $region9: #{tpu_custom_call.1} parent=1 // pred_fallthru
      _
    // Predicated region
    $region10: #{tpu_custom_call.1} parent=1 // pred_check
      _
    $region11: #{tpu_custom_call.1} parent=1 // pred_check_branch
      %31 = sbr.rel (0) target = $region13
    $region12: #{tpu_custom_call.1} parent=1 // pred_region
      %32 = dma.done [#allocation3], 64
    $region13: #{tpu_custom_call.1} parent=1 // pred_fallthru
      _
    // Predicated region
    $region14: #{tpu_custom_call.1} parent=1 // pred_check
      _
    $region15: #{tpu_custom_call.1} parent=1 // pred_check_branch
      %34 = sbr.rel (0) target = $region17
    $region16: #{tpu_custom_call.1} parent=1 // pred_region
      %35 = dma.done [#allocation6], 64
    $region17: #{tpu_custom_call.1} parent=1 // pred_fallthru
      _
    %v36 = vld [vmem:[#allocation2] sm:$0xf]
    %v37 = vld [vmem:[#allocation5] sm:$0xf]
    %v38 = vsub.f32 %v36, %v37
    %v39 = vmul.f32 %v38, %v38
    %vm40 = vcmask 257024
    %v41 = vsel %vm40, %v39, 0.0
    %42 = vadd.xlane.f32.xlu0 %v41
    %v43 = vpop.xlane.xlu0 %42
    %v44 = vand.u32 2147483647, %v36
    %vm46 = vcmp.ge.s32.totalorder %v44, 1073741824
    %v47 = vsel %vm46, 1.0, 0.0
    %v48 = vsel %vm40, %v47, 0.0
    %49 = vadd.xlane.f32.xlu0 %v48
    %v50 = vpop.xlane.xlu0 %49
    %vm51 = vcmp.ge.f32.partialorder %v50, 9.0
    %v52 = vsel %vm51, 1073741824, 0
    %v53 = vor.u32 %v52, 536870912
    %vm54 = vcmp.ge.s32.totalorder %v44, %v53
    %v55 = vsel %vm54, 1.0, 0.0
    %v56 = vsel %vm40, %v55, 0.0
    %57 = vadd.xlane.f32.xlu0 %v56
    %v58 = vpop.xlane.xlu0 %57
    %vm59 = vcmp.ge.f32.partialorder %v58, 9.0
    %v60 = vsel %vm59, %v53, %v52
    %v61 = vor.u32 %v60, 268435456
    %vm62 = vcmp.ge.s32.totalorder %v44, %v61
    %v63 = vsel %vm62, 1.0, 0.0
    %v64 = vsel %vm40, %v63, 0.0
    %65 = vadd.xlane.f32.xlu0 %v64
    %v66 = vpop.xlane.xlu0 %65
    %vm67 = vcmp.ge.f32.partialorder %v66, 9.0
    %v68 = vsel %vm67, %v61, %v60
    %v69 = vor.u32 %v68, 134217728
    %vm70 = vcmp.ge.s32.totalorder %v44, %v69
    %v71 = vsel %vm70, 1.0, 0.0
    %v72 = vsel %vm40, %v71, 0.0
    %73 = vadd.xlane.f32.xlu0 %v72
    %v74 = vpop.xlane.xlu0 %73
    %vm75 = vcmp.ge.f32.partialorder %v74, 9.0
    %v76 = vsel %vm75, %v69, %v68
    %v77 = vor.u32 %v76, 67108864
    %vm78 = vcmp.ge.s32.totalorder %v44, %v77
    %v79 = vsel %vm78, 1.0, 0.0
    %v80 = vsel %vm40, %v79, 0.0
    %81 = vadd.xlane.f32.xlu0 %v80
    %v82 = vpop.xlane.xlu0 %81
    %vm83 = vcmp.ge.f32.partialorder %v82, 9.0
    %v84 = vsel %vm83, %v77, %v76
    %v85 = vor.u32 %v84, 33554432
    %vm86 = vcmp.ge.s32.totalorder %v44, %v85
    %v87 = vsel %vm86, 1.0, 0.0
    %v88 = vsel %vm40, %v87, 0.0
    %89 = vadd.xlane.f32.xlu0 %v88
    %v90 = vpop.xlane.xlu0 %89
    %vm91 = vcmp.ge.f32.partialorder %v90, 9.0
    %v92 = vsel %vm91, %v85, %v84
    %v93 = vor.u32 %v92, 16777216
    %vm94 = vcmp.ge.s32.totalorder %v44, %v93
    %v95 = vsel %vm94, 1.0, 0.0
    %v96 = vsel %vm40, %v95, 0.0
    %97 = vadd.xlane.f32.xlu0 %v96
    %v98 = vpop.xlane.xlu0 %97
    %vm99 = vcmp.ge.f32.partialorder %v98, 9.0
    %v100 = vsel %vm99, %v93, %v92
    %v101 = vor.u32 %v100, 8388608
    %vm102 = vcmp.ge.s32.totalorder %v44, %v101
    %v103 = vsel %vm102, 1.0, 0.0
    %v104 = vsel %vm40, %v103, 0.0
    %105 = vadd.xlane.f32.xlu0 %v104
    %v106 = vpop.xlane.xlu0 %105
    %vm107 = vcmp.ge.f32.partialorder %v106, 9.0
    %v108 = vsel %vm107, %v101, %v100
    %v109 = vor.u32 %v108, 4194304
    %vm110 = vcmp.ge.s32.totalorder %v44, %v109
    %v111 = vsel %vm110, 1.0, 0.0
    %v112 = vsel %vm40, %v111, 0.0
    %113 = vadd.xlane.f32.xlu0 %v112
    %v114 = vpop.xlane.xlu0 %113
    %vm115 = vcmp.ge.f32.partialorder %v114, 9.0
    %v116 = vsel %vm115, %v109, %v108
    %v117 = vor.u32 %v116, 2097152
    %vm118 = vcmp.ge.s32.totalorder %v44, %v117
    %v119 = vsel %vm118, 1.0, 0.0
    %v120 = vsel %vm40, %v119, 0.0
    %121 = vadd.xlane.f32.xlu0 %v120
    %v122 = vpop.xlane.xlu0 %121
    %vm123 = vcmp.ge.f32.partialorder %v122, 9.0
    %v124 = vsel %vm123, %v117, %v116
    %v125 = vor.u32 %v124, 1048576
    %vm126 = vcmp.ge.s32.totalorder %v44, %v125
    %v127 = vsel %vm126, 1.0, 0.0
    %v128 = vsel %vm40, %v127, 0.0
    %129 = vadd.xlane.f32.xlu0 %v128
    %v130 = vpop.xlane.xlu0 %129
    %vm131 = vcmp.ge.f32.partialorder %v130, 9.0
    %v132 = vsel %vm131, %v125, %v124
    %v133 = vor.u32 %v132, 524288
    %vm134 = vcmp.ge.s32.totalorder %v44, %v133
    %v135 = vsel %vm134, 1.0, 0.0
    %v136 = vsel %vm40, %v135, 0.0
    %137 = vadd.xlane.f32.xlu0 %v136
    %v138 = vpop.xlane.xlu0 %137
    %vm139 = vcmp.ge.f32.partialorder %v138, 9.0
    %v140 = vsel %vm139, %v133, %v132
    %v141 = vor.u32 %v140, 262144
    %vm142 = vcmp.ge.s32.totalorder %v44, %v141
    %v143 = vsel %vm142, 1.0, 0.0
    %v144 = vsel %vm40, %v143, 0.0
    %145 = vadd.xlane.f32.xlu0 %v144
    %v146 = vpop.xlane.xlu0 %145
    %vm147 = vcmp.ge.f32.partialorder %v146, 9.0
    %v148 = vsel %vm147, %v141, %v140
    %v149 = vor.u32 %v148, 131072
    %vm150 = vcmp.ge.s32.totalorder %v44, %v149
    %v151 = vsel %vm150, 1.0, 0.0
    %v152 = vsel %vm40, %v151, 0.0
    %153 = vadd.xlane.f32.xlu0 %v152
    %v154 = vpop.xlane.xlu0 %153
    %vm155 = vcmp.ge.f32.partialorder %v154, 9.0
    %v156 = vsel %vm155, %v149, %v148
    %v157 = vor.u32 %v156, 65536
    %vm158 = vcmp.ge.s32.totalorder %v44, %v157
    %v159 = vsel %vm158, 1.0, 0.0
    %v160 = vsel %vm40, %v159, 0.0
    %161 = vadd.xlane.f32.xlu0 %v160
    %v162 = vpop.xlane.xlu0 %161
    %vm163 = vcmp.ge.f32.partialorder %v162, 9.0
    %v164 = vsel %vm163, %v157, %v156
    %v165 = vor.u32 %v164, 32768
    %vm166 = vcmp.ge.s32.totalorder %v44, %v165
    %v167 = vsel %vm166, 1.0, 0.0
    %v168 = vsel %vm40, %v167, 0.0
    %169 = vadd.xlane.f32.xlu0 %v168
    %v170 = vpop.xlane.xlu0 %169
    %vm171 = vcmp.ge.f32.partialorder %v170, 9.0
    %v172 = vsel %vm171, %v165, %v164
    %v173 = vor.u32 %v172, 16384
    %vm174 = vcmp.ge.s32.totalorder %v44, %v173
    %v175 = vsel %vm174, 1.0, 0.0
    %v176 = vsel %vm40, %v175, 0.0
    %177 = vadd.xlane.f32.xlu0 %v176
    %v178 = vpop.xlane.xlu0 %177
    %vm179 = vcmp.ge.f32.partialorder %v178, 9.0
    %v180 = vsel %vm179, %v173, %v172
    %v181 = vor.u32 %v180, 8192
    %vm182 = vcmp.ge.s32.totalorder %v44, %v181
    %v183 = vsel %vm182, 1.0, 0.0
    %v184 = vsel %vm40, %v183, 0.0
    %185 = vadd.xlane.f32.xlu0 %v184
    %v186 = vpop.xlane.xlu0 %185
    %vm187 = vcmp.ge.f32.partialorder %v186, 9.0
    %v188 = vsel %vm187, %v181, %v180
    %v189 = vor.u32 %v188, 4096
    %vm190 = vcmp.ge.s32.totalorder %v44, %v189
    %v191 = vsel %vm190, 1.0, 0.0
    %v192 = vsel %vm40, %v191, 0.0
    %193 = vadd.xlane.f32.xlu0 %v192
    %v194 = vpop.xlane.xlu0 %193
    %vm195 = vcmp.ge.f32.partialorder %v194, 9.0
    %v196 = vsel %vm195, %v189, %v188
    %v197 = vor.u32 %v196, 2048
    %vm198 = vcmp.ge.s32.totalorder %v44, %v197
    %v199 = vsel %vm198, 1.0, 0.0
    %v200 = vsel %vm40, %v199, 0.0
    %201 = vadd.xlane.f32.xlu0 %v200
    %v202 = vpop.xlane.xlu0 %201
    %vm203 = vcmp.ge.f32.partialorder %v202, 9.0
    %v204 = vsel %vm203, %v197, %v196
    %v205 = vor.u32 %v204, 1024
    %vm206 = vcmp.ge.s32.totalorder %v44, %v205
    %v207 = vsel %vm206, 1.0, 0.0
    %v208 = vsel %vm40, %v207, 0.0
    %209 = vadd.xlane.f32.xlu0 %v208
    %v210 = vpop.xlane.xlu0 %209
    %vm211 = vcmp.ge.f32.partialorder %v210, 9.0
    %v212 = vsel %vm211, %v205, %v204
    %v213 = vor.u32 %v212, 512
    %vm214 = vcmp.ge.s32.totalorder %v44, %v213
    %v215 = vsel %vm214, 1.0, 0.0
    %v216 = vsel %vm40, %v215, 0.0
    %217 = vadd.xlane.f32.xlu0 %v216
    %v218 = vpop.xlane.xlu0 %217
    %vm219 = vcmp.ge.f32.partialorder %v218, 9.0
    %v220 = vsel %vm219, %v213, %v212
    %v221 = vor.u32 %v220, 256
    %vm222 = vcmp.ge.s32.totalorder %v44, %v221
    %v223 = vsel %vm222, 1.0, 0.0
    %v224 = vsel %vm40, %v223, 0.0
    %225 = vadd.xlane.f32.xlu0 %v224
    %v226 = vpop.xlane.xlu0 %225
    %vm227 = vcmp.ge.f32.partialorder %v226, 9.0
    %v228 = vsel %vm227, %v221, %v220
    %v229 = vor.u32 %v228, 128
    %vm230 = vcmp.ge.s32.totalorder %v44, %v229
    %v231 = vsel %vm230, 1.0, 0.0
    %v232 = vsel %vm40, %v231, 0.0
    %233 = vadd.xlane.f32.xlu0 %v232
    %v234 = vpop.xlane.xlu0 %233
    %vm235 = vcmp.ge.f32.partialorder %v234, 9.0
    %v236 = vsel %vm235, %v229, %v228
    %v237 = vor.u32 %v236, 64
    %vm238 = vcmp.ge.s32.totalorder %v44, %v237
    %v239 = vsel %vm238, 1.0, 0.0
    %v240 = vsel %vm40, %v239, 0.0
    %241 = vadd.xlane.f32.xlu0 %v240
    %v242 = vpop.xlane.xlu0 %241
    %vm243 = vcmp.ge.f32.partialorder %v242, 9.0
    %v244 = vsel %vm243, %v237, %v236
    %v245 = vor.u32 %v244, 32
    %vm246 = vcmp.ge.s32.totalorder %v44, %v245
    %v247 = vsel %vm246, 1.0, 0.0
    %v248 = vsel %vm40, %v247, 0.0
    %249 = vadd.xlane.f32.xlu0 %v248
    %v250 = vpop.xlane.xlu0 %249
    %vm251 = vcmp.ge.f32.partialorder %v250, 9.0
    %v252 = vsel %vm251, %v245, %v244
    %v253 = vor.u32 %v252, 16
    %vm254 = vcmp.ge.s32.totalorder %v44, %v253
    %v255 = vsel %vm254, 1.0, 0.0
    %v256 = vsel %vm40, %v255, 0.0
    %257 = vadd.xlane.f32.xlu0 %v256
    %v258 = vpop.xlane.xlu0 %257
    %vm259 = vcmp.ge.f32.partialorder %v258, 9.0
    %v260 = vsel %vm259, %v253, %v252
    %v261 = vor.u32 %v260, 8
    %vm262 = vcmp.ge.s32.totalorder %v44, %v261
    %v263 = vsel %vm262, 1.0, 0.0
    %v264 = vsel %vm40, %v263, 0.0
    %265 = vadd.xlane.f32.xlu0 %v264
    %v266 = vpop.xlane.xlu0 %265
    %vm267 = vcmp.ge.f32.partialorder %v266, 9.0
    %v268 = vsel %vm267, %v261, %v260
    %v269 = vor.u32 %v268, 4
    %vm270 = vcmp.ge.s32.totalorder %v44, %v269
    %v271 = vsel %vm270, 1.0, 0.0
    %v272 = vsel %vm40, %v271, 0.0
    %273 = vadd.xlane.f32.xlu0 %v272
    %v274 = vpop.xlane.xlu0 %273
    %vm275 = vcmp.ge.f32.partialorder %v274, 9.0
    %v276 = vsel %vm275, %v269, %v268
    %v277 = vor.u32 %v276, 2
    %vm278 = vcmp.ge.s32.totalorder %v44, %v277
    %v279 = vsel %vm278, 1.0, 0.0
    %v280 = vsel %vm40, %v279, 0.0
    %281 = vadd.xlane.f32.xlu0 %v280
    %v282 = vpop.xlane.xlu0 %281
    %vm283 = vcmp.ge.f32.partialorder %v282, 9.0
    %v284 = vsel %vm283, %v277, %v276
    %v285 = vor.u32 %v284, 1
    %vm286 = vcmp.ge.s32.totalorder %v44, %v285
    %v287 = vsel %vm286, 1.0, 0.0
    %v288 = vsel %vm40, %v287, 0.0
    %289 = vadd.xlane.f32.xlu0 %v288
    %v290 = vpop.xlane.xlu0 %289
    %vm291 = vcmp.ge.f32.partialorder %v290, 9.0
    %v292 = vsel %vm291, %v285, %v284
    %vm293 = vcmp.gt.s32.totalorder %v44, %v292
    %v294 = vsel %vm293, 1.0, 0.0
    %v295 = vsel %vm40, %v294, 0.0
    %296 = vadd.xlane.f32.xlu0 %v295
    %v297 = vpop.xlane.xlu0 %296
    %v298 = vsel %vm293, %v44, 0.0
    %v299 = vsel %vm40, %v298, 0.0
    %300 = vadd.xlane.f32.xlu0 %v299
    %v301 = vpop.xlane.xlu0 %300
    %v303 = vsub.f32 9.0, %v297
    %v304 = vmul.f32 %v303, %v292
    %v305 = vadd.f32 %v301, %v304
    %s306 = smul.u32 0, 4
    %v307 = vlaneseq
    %v308 = vshrl.u32 %v307, 7
    %v309 = vstv %s306
    %v310 = vadd.s32 %v309, %v308
    %vm311 = vcmp.lt.s32.totalorder %v310, 4
    %v312 = vsel %vm311, %v305, 1.0
    %v313 = vrcp.pop %v312
    %v314 = vmul.f32 %v313, 9.0
    %v315 = vmul.f32 %v314, %v314
    %v316 = vmul.f32 %v315, %v43
    %v317 = vsel %vm311, %v316, 0.0
    %vm318 = vcmask 1043456
    %v319 = vsel %vm318, %v317, 0.0
    %v320 = vrot.slane %v319, 4
    %v321 = vadd.f32 %v319, %v320
    %v322 = vrot.slane %v321, 2
    %v323 = vadd.f32 %v321, %v322
    %v324 = vrot.slane %v323, 1
    %v325 = vadd.f32 %v323, %v324
    %326 = vst [vmem:[#allocation7] sm:$0x1] %v325
    // Predicated region
    $region18: #{tpu_custom_call.1} parent=1 // pred_check
      _
    $region19: #{tpu_custom_call.1} parent=1 // pred_check_branch
      %328 = sbr.rel (0) target = $region21
    $region20: #{tpu_custom_call.1} parent=1 // pred_region
      %s330 = ssub.s32 16, 16
      %331 = vsyncadd [#allocation4], %s330
      %s333 = sshll.u32 [#allocation7], 4
      %s334 = int_to_ptr.vmem [resolvable:$true] %s333
      %336 = dma.vmem_to_hbm [thread:$0]  %s334, 16, %s2, [#allocation4]
    $region21: #{tpu_custom_call.1} parent=1 // pred_fallthru
      _
    // Predicated region
    $region22: #{tpu_custom_call.1} parent=1 // pred_check
      _
    $region23: #{tpu_custom_call.1} parent=1 // pred_check_branch
      %338 = sbr.rel (0) target = $region25
    $region24: #{tpu_custom_call.1} parent=1 // pred_region
      %339 = dma.done [#allocation4], 16
    $region25: #{tpu_custom_call.1} parent=1 // pred_fallthru
      _
    %340 = vsyncpa [#allocation3], 1
    %341 = vsyncpa [#allocation6], 1
    %342 = vsyncpa [#allocation4], 1

</llo_original>
